<compile_context>
chip_gen: v7x
topology: tpu7x:2x2x1
jax: 0.10.0
libtpu: 0.0.40
codegen_flags: <defaults>
</compile_context>

<pallas_src>
import functools

import jax
import jax.numpy as jnp
import numpy as np
from jax.experimental import pallas as pl
from jax.experimental.pallas import tpu as pltpu

_NORM = 9.0                              # NCEDecoder.norm
_VMEM_TABLE_LIMIT = 4 * 1024 * 1024      # table bytes below which it lives in VMEM
_VMEM_LOGITS_LIMIT = 8 * 1024 * 1024     # tb*V*4 budget for the full-logits path


# ---------------------------------------------------------------------------
# Path 1: vocab small enough that the (V, H) table lives in VMEM.
# Gather on-chip: full logits (tb, V) on the MXU, then masked lane reduces
# select the S candidate columns per row.  No HBM row DMAs.
# ---------------------------------------------------------------------------
def _nce_vmem_kernel(x_ref,      # VMEM (tb, H)  f32
                     idx_ref,    # VMEM (tb, S)  i32
                     bias_ref,   # VMEM (tb, S)  f32
                     tab_ref,    # VMEM (V, H)   f32
                     o_ref):     # VMEM (tb, S)  f32
    tb = x_ref.shape[0]
    S = o_ref.shape[1]
    V = tab_ref.shape[0]

    # (tb, V) = x @ table^T on the MXU, f32 accumulation.
    full = jax.lax.dot_general(
        x_ref[...], tab_ref[...],
        dimension_numbers=(((1,), (1,)), ((), ())),
        preferred_element_type=jnp.float32)

    idx = idx_ref[...]                                         # (tb, S)
    iota_v = jax.lax.broadcasted_iota(jnp.int32, (tb, V), 1)   # (tb, V)

    cols = []
    for s in range(S):                       # S = 1 + nsample, small & static
        sel = iota_v == idx[:, s:s + 1]      # (tb, V) one-hot row mask
        cols.append(jnp.sum(jnp.where(sel, full, 0.0), axis=1, keepdims=True))
    score = jnp.concatenate(cols, axis=1)    # (tb, S)

    o_ref[...] = jnp.exp(score + bias_ref[...] - _NORM)


# ---------------------------------------------------------------------------
# Path 2: large vocab.  Table stays in HBM; indices are scalar-prefetched into
# SMEM; rows are DMA-gathered per candidate chunk into a double-buffered VMEM
# scratch so the next chunk's DMAs overlap this chunk's VPU score math.
# ---------------------------------------------------------------------------
def _nce_dma_kernel(idx_ref,    # SMEM (S*B,) i32, s-major: idx[s*B + b]
                    x_ref,      # VMEM (tb, H) f32
                    bias_ref,   # VMEM (tb, S) f32
                    tab_ref,    # HBM  (V, H)  f32
                    o_ref,      # VMEM (tb, S) f32
                    gbuf,       # VMEM (2, tb, H) f32  (double buffer)
                    sems):      # DMA semaphores (2,)
    i = pl.program_id(0)
    tb = x_ref.shape[0]
    S = o_ref.shape[1]
    V = tab_ref.shape[0]
    b_total = pl.num_programs(0) * tb
    base = i * tb

    def issue(s, slot):
        # One row DMA per batch element of this candidate chunk.  The flat
        # index array is s-major so the walk is a single add per row.
        off0 = s * b_total + base

        def body(b, carry):
            v = idx_ref[off0 + b]
            # Clamp so a bad index cannot trigger an out-of-bounds HBM DMA
            # (torch would raise; we gather the clamped row instead).
            v = jnp.clip(v, 0, V - 1)
            pltpu.make_async_copy(tab_ref.at[pl.ds(v, 1)],
                                  gbuf.at[slot, pl.ds(b, 1)],
                                  sems.at[slot]).start()
            return carry

        jax.lax.fori_loop(0, tb, body, 0, unroll=4)

    def drain(slot):
        # The DMA semaphore counts bytes: a single wait sized for all tb rows
        # drains every row copy that was issued into this slot.
        pltpu.make_async_copy(tab_ref.at[pl.ds(0, tb)],
                              gbuf.at[slot],
                              sems.at[slot]).wait()

    issue(0, 0)                          # prime the pipeline
    x = x_ref[...]                       # (tb, H)

    cols = []
    for s in range(S):                   # S is small & static
        slot = s % 2
        if s + 1 < S:
            issue(s + 1, 1 - slot)       # prefetch next chunk (SMEM reads
                                         # happen before the .wait below)
        drain(slot)
        cols.append(jnp.sum(gbuf[slot] * x, axis=-1, keepdims=True))  # (tb, 1)
    score = jnp.concatenate(cols, axis=1)                             # (tb, S)

    o_ref[...] = jnp.exp(score + bias_ref[...] - _NORM)


# ---------------------------------------------------------------------------
# Wrapper
# ---------------------------------------------------------------------------
def nce_scores(indices, rnn_output, emb_w, bias_w, *, force_dma=False):
    """probs[b, s] = exp(bias[idx[b,s]] + <emb[idx[b,s]], x[b]> - 9), (B, S)."""
    B, S = indices.shape
    V, H = emb_w.shape

    indices = indices.astype(jnp.int32)
    x = rnn_output.astype(jnp.float32)
    table = emb_w.astype(jnp.float32)
    # Tiny (B, S) bias gather done by XLA in the wrapper (no fused bias column,
    # no per-call (V, H+1) table copy).
    bias_vals = bias_w.reshape(V).astype(jnp.float32)[indices]        # (B, S)

    # Batch tile: 128 lanes of batch per step when B allows (multiple parallel
    # grid steps), otherwise the whole batch in one step (block shapes stay
    # legal w.r.t. the (8, 128) tiling rules).
    tb = 128 if (B % 128 == 0 and B > 128) else B
    grid = (B // tb,)

    table_bytes = V * H * 4
    use_vmem_table = (not force_dma) and (
        (table_bytes <= _VMEM_TABLE_LIMIT and tb * V * 4 <= _VMEM_LOGITS_LIMIT)
        or V < tb)   # degenerate tiny-vocab case: DMA drain assumes V >= tb

    if use_vmem_table:
        vmem_need = (2 * table_bytes          # table (possibly double-buffered)
                     + 4 * tb * V * 4         # full logits + transients
                     + 4 * tb * H * 4         # activations block (double-buffered)
                     + 8 * tb * S * 4         # idx / bias / out blocks
                     + (2 << 20))
        return pl.pallas_call(
            _nce_vmem_kernel,
            out_shape=jax.ShapeDtypeStruct((B, S), jnp.float32),
            grid=grid,
            in_specs=[
                pl.BlockSpec((tb, H), lambda i: (i, 0)),   # activations
                pl.BlockSpec((tb, S), lambda i: (i, 0)),   # indices
                pl.BlockSpec((tb, S), lambda i: (i, 0)),   # bias values
                pl.BlockSpec((V, H), lambda i: (0, 0)),    # whole table, VMEM
            ],
            out_specs=pl.BlockSpec((tb, S), lambda i: (i, 0)),
            compiler_params=pltpu.CompilerParams(
                dimension_semantics=("parallel",),
                vmem_limit_bytes=int(min(48 << 20, max(32 << 20, vmem_need)))),
        )(x, indices, bias_vals, table)

    # Large vocab: HBM table + chunked, double-buffered row-gather DMAs.
    idx_flat = indices.T.reshape(-1)           # s-major flat (S*B,) for SMEM
    vmem_need = (2 * tb * H * 4                # gbuf (2 slots)
                 + 4 * tb * H * 4              # activations block (double-buffered)
                 + 8 * tb * S * 4              # bias / out blocks
                 + (2 << 20))
    return pl.pallas_call(
        _nce_dma_kernel,
        out_shape=jax.ShapeDtypeStruct((B, S), jnp.float32),
        grid_spec=pltpu.PrefetchScalarGridSpec(
            num_scalar_prefetch=1,                 # flat indices -> SMEM
            grid=grid,
            in_specs=[
                pl.BlockSpec((tb, H), lambda i, idx: (i, 0)),   # activations
                pl.BlockSpec((tb, S), lambda i, idx: (i, 0)),   # bias values
                pl.BlockSpec(memory_space=pl.ANY),              # table in HBM
            ],
            out_specs=pl.BlockSpec((tb, S), lambda i, idx: (i, 0)),
            scratch_shapes=[
                pltpu.VMEM((2, tb, H), jnp.float32),            # double buffer
                pltpu.SemaphoreType.DMA((2,)),                  # one per slot
            ],
        ),
        compiler_params=pltpu.CompilerParams(
            dimension_semantics=("parallel",),
            vmem_limit_bytes=int(min(48 << 20, max(32 << 20, vmem_need)))),
    )(idx_flat, x, bias_vals, table)


def nce_decoder_forward(rnn_output, target, emb_w, bias_w, noise_dist,
                        nsample, key):
    """JAX/Pallas equivalent of NCEDecoder.forward(input, target)."""
    B = rnn_output.shape[0]
    # sample ~ noise_dist, shape (B, nsample)   (AliasMethod.draw equivalent)
    sample = jax.random.categorical(
        key, jnp.log(noise_dist), shape=(B, nsample)).astype(jnp.int32)
    indices = jnp.concatenate(
        [target[:, None].astype(jnp.int32), sample], axis=1)   # (B, 1+nsample)

    probs = nce_scores(indices, rnn_output, emb_w, bias_w)     # (B, 1+nsample)
    return probs[:, 0], probs[:, 1:], sample


def _reference_scores(indices, rnn_output, emb_w, bias_w):
    """Pure-JAX reference of the score computation (for a sanity check)."""
    embed = emb_w[indices]                           # (B, S, H)
    bias = bias_w.reshape(-1)[indices]               # (B, S)
    score = jnp.einsum("bsh,bh->bs", embed, rnn_output) + bias
    return jnp.exp(score - _NORM)


if __name__ == "__main__":
    # small, deterministic problem sizes
    B, H, V, nsample = 16, 32, 64, 10      # batch, nhid, ntoken, nsample

    key = jax.random.PRNGKey(0)
    k_emb, k_bias, k_x, k_tgt, k_sample = jax.random.split(key, 5)

    # init_weights(): embeddings ~ U(-0.1, 0.1); bias made nonzero here so the
    # bias-add path is actually validated.
    emb_w = jax.random.uniform(k_emb, (V, H), jnp.float32, -0.1, 0.1)
    bias_w = jax.random.uniform(k_bias, (V, 1), jnp.float32, -0.1, 0.1)

    # noise distribution (normalized inside the module)
    noise_dist = jnp.arange(1, V + 1, dtype=jnp.float32)
    noise_dist = noise_dist / noise_dist.sum()

    rnn_output = jax.random.normal(k_x, (B, H), jnp.float32)
    target = jax.random.randint(k_tgt, (B,), 0, V, jnp.int32)

    fwd = jax.jit(functools.partial(nce_decoder_forward, nsample=nsample))
    target_prob, sample_prob, sample = fwd(rnn_output, target, emb_w, bias_w,
                                           noise_dist, key=k_sample)
    jax.block_until_ready((target_prob, sample_prob, sample))

    # sanity check against a pure-JAX reference (VMEM-table path)
    indices = jnp.concatenate([target[:, None], sample], axis=1)
    ref = _reference_scores(indices, rnn_output, emb_w, bias_w)
    got = jnp.concatenate([target_prob[:, None], sample_prob], axis=1)
    np.testing.assert_allclose(np.asarray(got), np.asarray(ref),
                               rtol=1e-5, atol=1e-6)

    # also exercise the large-vocab HBM DMA-gather path on the same problem
    dma_fn = jax.jit(functools.partial(nce_scores, force_dma=True))
    got_dma = dma_fn(indices, rnn_output, emb_w, bias_w)
    jax.block_until_ready(got_dma)
    np.testing.assert_allclose(np.asarray(got_dma), np.asarray(ref),
                               rtol=1e-5, atol=1e-6)

    assert target_prob.shape == (B,)
    assert sample_prob.shape == (B, nsample)
    assert sample.shape == (B, nsample)

    print("KERNEL_OK")
</pallas_src>

<mosaic_0001>
module attributes {stable_mosaic.version = 11 : i64} {
  func.func @_nce_vmem_kernel(%arg0: i32, %arg1: memref<16x32xf32, #tpu.memory_space<vmem>>, %arg2: memref<16x11xi32, #tpu.memory_space<vmem>>, %arg3: memref<16x11xf32, #tpu.memory_space<vmem>>, %arg4: memref<64x32xf32, #tpu.memory_space<vmem>>, %arg5: memref<16x11xf32, #tpu.memory_space<vmem>>) attributes {dimension_semantics = [#tpu.dimension_semantics<parallel>], iteration_bounds = array<i64: 1>, scalar_prefetch = 0 : i64, scratch_operands = 0 : i64, tpu.core_type = #tpu.core_type<tc>, window_params = [{transform_indices = @transform_0, window_bounds = array<i64: 16, 32>}, {transform_indices = @transform_1, window_bounds = array<i64: 16, 11>}, {transform_indices = @transform_2, window_bounds = array<i64: 16, 11>}, {pipeline_mode = #tpu.pipeline_mode<synchronous>, transform_indices = @transform_3, window_bounds = array<i64: 64, 32>}, {transform_indices = @transform_4, window_bounds = array<i64: 16, 11>}]} {
    %c0 = arith.constant 0 : index
    %c0_0 = arith.constant 0 : index
    %0 = vector.load %arg1[%c0, %c0_0] : memref<16x32xf32, #tpu.memory_space<vmem>>, vector<16x32xf32>
    %c0_1 = arith.constant 0 : index
    %c0_2 = arith.constant 0 : index
    %1 = vector.load %arg4[%c0_1, %c0_2] : memref<64x32xf32, #tpu.memory_space<vmem>>, vector<64x32xf32>
    %cst = arith.constant dense<0.000000e+00> : vector<16x64xf32>
    %2 = tpu.matmul %0, %1, %cst {dimension_numbers = #tpu.dot_dimension_numbers<[1], [1], [0], [0], [0, 0, 1, 0], [], []>} : vector<16x32xf32>, vector<64x32xf32>, vector<16x64xf32> -> vector<16x64xf32>
    %c0_3 = arith.constant 0 : index
    %c0_4 = arith.constant 0 : index
    %3 = vector.load %arg2[%c0_3, %c0_4] : memref<16x11xi32, #tpu.memory_space<vmem>>, vector<16x11xi32>
    %4 = tpu.iota {dimensions = array<i32: 1>} : vector<16x64xi32>
    %5 = vector.extract_strided_slice %3 {offsets = [0, 0], sizes = [16, 1], strides = [1, 1]} : vector<16x11xi32> to vector<16x1xi32>
    %6 = vector.broadcast %5 : vector<16x1xi32> to vector<16x64xi32>
    %7 = arith.cmpi eq, %4, %6 : vector<16x64xi32>
    %cst_5 = arith.constant 0.000000e+00 : f32
    %8 = vector.broadcast %cst_5 : f32 to vector<16x64xf32>
    %9 = arith.select %7, %2, %8 : vector<16x64xi1>, vector<16x64xf32>
    %cst_6 = arith.constant dense<0.000000e+00> : vector<16xf32>
    %10 = vector.multi_reduction <add>, %9, %cst_6 [1] : vector<16x64xf32> to vector<16xf32>
    %11 = vector.shape_cast %10 : vector<16xf32> to vector<16x1xf32>
    %12 = vector.extract_strided_slice %3 {offsets = [0, 1], sizes = [16, 1], strides = [1, 1]} : vector<16x11xi32> to vector<16x1xi32>
    %13 = vector.broadcast %12 : vector<16x1xi32> to vector<16x64xi32>
    %14 = arith.cmpi eq, %4, %13 : vector<16x64xi32>
    %cst_7 = arith.constant 0.000000e+00 : f32
    %15 = vector.broadcast %cst_7 : f32 to vector<16x64xf32>
    %16 = arith.select %14, %2, %15 : vector<16x64xi1>, vector<16x64xf32>
    %cst_8 = arith.constant dense<0.000000e+00> : vector<16xf32>
    %17 = vector.multi_reduction <add>, %16, %cst_8 [1] : vector<16x64xf32> to vector<16xf32>
    %18 = vector.shape_cast %17 : vector<16xf32> to vector<16x1xf32>
    %19 = vector.extract_strided_slice %3 {offsets = [0, 2], sizes = [16, 1], strides = [1, 1]} : vector<16x11xi32> to vector<16x1xi32>
    %20 = vector.broadcast %19 : vector<16x1xi32> to vector<16x64xi32>
    %21 = arith.cmpi eq, %4, %20 : vector<16x64xi32>
    %cst_9 = arith.constant 0.000000e+00 : f32
    %22 = vector.broadcast %cst_9 : f32 to vector<16x64xf32>
    %23 = arith.select %21, %2, %22 : vector<16x64xi1>, vector<16x64xf32>
    %cst_10 = arith.constant dense<0.000000e+00> : vector<16xf32>
    %24 = vector.multi_reduction <add>, %23, %cst_10 [1] : vector<16x64xf32> to vector<16xf32>
    %25 = vector.shape_cast %24 : vector<16xf32> to vector<16x1xf32>
    %26 = vector.extract_strided_slice %3 {offsets = [0, 3], sizes = [16, 1], strides = [1, 1]} : vector<16x11xi32> to vector<16x1xi32>
    %27 = vector.broadcast %26 : vector<16x1xi32> to vector<16x64xi32>
    %28 = arith.cmpi eq, %4, %27 : vector<16x64xi32>
    %cst_11 = arith.constant 0.000000e+00 : f32
    %29 = vector.broadcast %cst_11 : f32 to vector<16x64xf32>
    %30 = arith.select %28, %2, %29 : vector<16x64xi1>, vector<16x64xf32>
    %cst_12 = arith.constant dense<0.000000e+00> : vector<16xf32>
    %31 = vector.multi_reduction <add>, %30, %cst_12 [1] : vector<16x64xf32> to vector<16xf32>
    %32 = vector.shape_cast %31 : vector<16xf32> to vector<16x1xf32>
    %33 = vector.extract_strided_slice %3 {offsets = [0, 4], sizes = [16, 1], strides = [1, 1]} : vector<16x11xi32> to vector<16x1xi32>
    %34 = vector.broadcast %33 : vector<16x1xi32> to vector<16x64xi32>
    %35 = arith.cmpi eq, %4, %34 : vector<16x64xi32>
    %cst_13 = arith.constant 0.000000e+00 : f32
    %36 = vector.broadcast %cst_13 : f32 to vector<16x64xf32>
    %37 = arith.select %35, %2, %36 : vector<16x64xi1>, vector<16x64xf32>
    %cst_14 = arith.constant dense<0.000000e+00> : vector<16xf32>
    %38 = vector.multi_reduction <add>, %37, %cst_14 [1] : vector<16x64xf32> to vector<16xf32>
    %39 = vector.shape_cast %38 : vector<16xf32> to vector<16x1xf32>
    %40 = vector.extract_strided_slice %3 {offsets = [0, 5], sizes = [16, 1], strides = [1, 1]} : vector<16x11xi32> to vector<16x1xi32>
    %41 = vector.broadcast %40 : vector<16x1xi32> to vector<16x64xi32>
    %42 = arith.cmpi eq, %4, %41 : vector<16x64xi32>
    %cst_15 = arith.constant 0.000000e+00 : f32
    %43 = vector.broadcast %cst_15 : f32 to vector<16x64xf32>
    %44 = arith.select %42, %2, %43 : vector<16x64xi1>, vector<16x64xf32>
    %cst_16 = arith.constant dense<0.000000e+00> : vector<16xf32>
    %45 = vector.multi_reduction <add>, %44, %cst_16 [1] : vector<16x64xf32> to vector<16xf32>
    %46 = vector.shape_cast %45 : vector<16xf32> to vector<16x1xf32>
    %47 = vector.extract_strided_slice %3 {offsets = [0, 6], sizes = [16, 1], strides = [1, 1]} : vector<16x11xi32> to vector<16x1xi32>
    %48 = vector.broadcast %47 : vector<16x1xi32> to vector<16x64xi32>
    %49 = arith.cmpi eq, %4, %48 : vector<16x64xi32>
    %cst_17 = arith.constant 0.000000e+00 : f32
    %50 = vector.broadcast %cst_17 : f32 to vector<16x64xf32>
    %51 = arith.select %49, %2, %50 : vector<16x64xi1>, vector<16x64xf32>
    %cst_18 = arith.constant dense<0.000000e+00> : vector<16xf32>
    %52 = vector.multi_reduction <add>, %51, %cst_18 [1] : vector<16x64xf32> to vector<16xf32>
    %53 = vector.shape_cast %52 : vector<16xf32> to vector<16x1xf32>
    %54 = vector.extract_strided_slice %3 {offsets = [0, 7], sizes = [16, 1], strides = [1, 1]} : vector<16x11xi32> to vector<16x1xi32>
    %55 = vector.broadcast %54 : vector<16x1xi32> to vector<16x64xi32>
    %56 = arith.cmpi eq, %4, %55 : vector<16x64xi32>
    %cst_19 = arith.constant 0.000000e+00 : f32
    %57 = vector.broadcast %cst_19 : f32 to vector<16x64xf32>
    %58 = arith.select %56, %2, %57 : vector<16x64xi1>, vector<16x64xf32>
    %cst_20 = arith.constant dense<0.000000e+00> : vector<16xf32>
    %59 = vector.multi_reduction <add>, %58, %cst_20 [1] : vector<16x64xf32> to vector<16xf32>
    %60 = vector.shape_cast %59 : vector<16xf32> to vector<16x1xf32>
    %61 = vector.extract_strided_slice %3 {offsets = [0, 8], sizes = [16, 1], strides = [1, 1]} : vector<16x11xi32> to vector<16x1xi32>
    %62 = vector.broadcast %61 : vector<16x1xi32> to vector<16x64xi32>
    %63 = arith.cmpi eq, %4, %62 : vector<16x64xi32>
    %cst_21 = arith.constant 0.000000e+00 : f32
    %64 = vector.broadcast %cst_21 : f32 to vector<16x64xf32>
    %65 = arith.select %63, %2, %64 : vector<16x64xi1>, vector<16x64xf32>
    %cst_22 = arith.constant dense<0.000000e+00> : vector<16xf32>
    %66 = vector.multi_reduction <add>, %65, %cst_22 [1] : vector<16x64xf32> to vector<16xf32>
    %67 = vector.shape_cast %66 : vector<16xf32> to vector<16x1xf32>
    %68 = vector.extract_strided_slice %3 {offsets = [0, 9], sizes = [16, 1], strides = [1, 1]} : vector<16x11xi32> to vector<16x1xi32>
    %69 = vector.broadcast %68 : vector<16x1xi32> to vector<16x64xi32>
    %70 = arith.cmpi eq, %4, %69 : vector<16x64xi32>
    %cst_23 = arith.constant 0.000000e+00 : f32
    %71 = vector.broadcast %cst_23 : f32 to vector<16x64xf32>
    %72 = arith.select %70, %2, %71 : vector<16x64xi1>, vector<16x64xf32>
    %cst_24 = arith.constant dense<0.000000e+00> : vector<16xf32>
    %73 = vector.multi_reduction <add>, %72, %cst_24 [1] : vector<16x64xf32> to vector<16xf32>
    %74 = vector.shape_cast %73 : vector<16xf32> to vector<16x1xf32>
    %75 = vector.extract_strided_slice %3 {offsets = [0, 10], sizes = [16, 1], strides = [1, 1]} : vector<16x11xi32> to vector<16x1xi32>
    %76 = vector.broadcast %75 : vector<16x1xi32> to vector<16x64xi32>
    %77 = arith.cmpi eq, %4, %76 : vector<16x64xi32>
    %cst_25 = arith.constant 0.000000e+00 : f32
    %78 = vector.broadcast %cst_25 : f32 to vector<16x64xf32>
    %79 = arith.select %77, %2, %78 : vector<16x64xi1>, vector<16x64xf32>
    %cst_26 = arith.constant dense<0.000000e+00> : vector<16xf32>
    %80 = vector.multi_reduction <add>, %79, %cst_26 [1] : vector<16x64xf32> to vector<16xf32>
    %81 = vector.shape_cast %80 : vector<16xf32> to vector<16x1xf32>
    %82 = tpu.concatenate %11, %18, %25, %32, %39, %46, %53, %60, %67, %74, %81 in 1 : vector<16x1xf32>, vector<16x1xf32>, vector<16x1xf32>, vector<16x1xf32>, vector<16x1xf32>, vector<16x1xf32>, vector<16x1xf32>, vector<16x1xf32>, vector<16x1xf32>, vector<16x1xf32>, vector<16x1xf32> -> vector<16x11xf32>
    %c0_27 = arith.constant 0 : index
    %c0_28 = arith.constant 0 : index
    %83 = vector.load %arg3[%c0_27, %c0_28] : memref<16x11xf32, #tpu.memory_space<vmem>>, vector<16x11xf32>
    %84 = arith.addf %82, %83 : vector<16x11xf32>
    %cst_29 = arith.constant 9.000000e+00 : f32
    %85 = vector.broadcast %cst_29 : f32 to vector<16x11xf32>
    %86 = arith.subf %84, %85 : vector<16x11xf32>
    %87 = math.exp %86 : vector<16x11xf32>
    %c0_30 = arith.constant 0 : index
    %c0_31 = arith.constant 0 : index
    %88 = vector.load %arg5[%c0_30, %c0_31] : memref<16x11xf32, #tpu.memory_space<vmem>>, vector<16x11xf32>
    tpu.vector_store %arg5[%c0_30, %c0_31], %87 {strides = array<i32>} : memref<16x11xf32, #tpu.memory_space<vmem>>, vector<16x11xf32>,
    return
  }
  func.func @transform_0(%arg0: i32) -> (i32, i32) {
    %c0_i32 = arith.constant 0 : i32
    %c0_i32_0 = arith.constant 0 : i32
    return %arg0, %c0_i32 : i32, i32
  }
  func.func @transform_1(%arg0: i32) -> (i32, i32) {
    %c0_i32 = arith.constant 0 : i32
    %c0_i32_0 = arith.constant 0 : i32
    return %arg0, %c0_i32 : i32, i32
  }
  func.func @transform_2(%arg0: i32) -> (i32, i32) {
    %c0_i32 = arith.constant 0 : i32
    %c0_i32_0 = arith.constant 0 : i32
    return %arg0, %c0_i32 : i32, i32
  }
  func.func @transform_3(%arg0: i32) -> (i32, i32) {
    %c0_i32 = arith.constant 0 : i32
    %c0_i32_0 = arith.constant 0 : i32
    %c0_i32_1 = arith.constant 0 : i32
    return %c0_i32, %c0_i32_0 : i32, i32
  }
  func.func @transform_4(%arg0: i32) -> (i32, i32) {
    %c0_i32 = arith.constant 0 : i32
    %c0_i32_0 = arith.constant 0 : i32
    return %arg0, %c0_i32 : i32, i32
  }
}

</mosaic_0001>

<llo_original>
// kernel: nce_decoder_forward.1
$region0: #{nce_decoder_forward.1}
  #allocation0 [shape = 'u32[]', space=smem, size = 0x4, offset = 0x4, fixed_abs, tag = 'smem constant byte address 0x4 - core index']
  #allocation1 [shape = 'u32[144,128]{1,0:T(1,128)}', space=vmem, size = 0x12000, scoped, tag = 'internal scratch']
  %s0 = inlined_call_operand.vmem [shape: f32[16,32], index: 0, kind: input, shape index: {}]
  %s1 = inlined_call_operand.vmem [shape: s32[16,11], index: 1, kind: input, shape index: {}]
  %s2 = inlined_call_operand.vmem [shape: f32[16,11], index: 2, kind: input, shape index: {}]
  %s3 = inlined_call_operand.vmem [shape: f32[64,32], index: 3, kind: input, shape index: {}]
  %s4 = inlined_call_operand.vmem [shape: f32[16,11], index: 4, kind: output, shape index: {}]
  %s5 = sld [smem:[#allocation0]]
  $region26: #{nce_decoder_forward.1} parent=0
    _
  %s7 = ssub.s32 1, %s5
  %s8 = scalar_select 0, %s7, %s5
  // Predicated region
  $region2: #{nce_decoder_forward.1} parent=0 // pred_check
    _
  $region3: #{nce_decoder_forward.1} parent=0 // pred_check_branch
    %10 = sbr.rel (0) target = $region5
  $region4: #{nce_decoder_forward.1} parent=0 // pred_region
    _
  $region5: #{nce_decoder_forward.1} parent=0 // pred_fallthru
    _
  // Predicated region
  $region6: #{nce_decoder_forward.1} parent=0 // pred_check
    _
  $region7: #{nce_decoder_forward.1} parent=0 // pred_check_branch
    %12 = sbr.rel (0) target = $region9
  $region8: #{nce_decoder_forward.1} parent=0 // pred_region
    _
  $region9: #{nce_decoder_forward.1} parent=0 // pred_fallthru
    _
  // Predicated region
  $region10: #{nce_decoder_forward.1} parent=0 // pred_check
    _
  $region11: #{nce_decoder_forward.1} parent=0 // pred_check_branch
    %14 = sbr.rel (0) target = $region13
  $region12: #{nce_decoder_forward.1} parent=0 // pred_region
    _
  $region13: #{nce_decoder_forward.1} parent=0 // pred_fallthru
    _
  // Predicated region
  $region14: #{nce_decoder_forward.1} parent=0 // pred_check
    _
  $region15: #{nce_decoder_forward.1} parent=0 // pred_check_branch
    %16 = sbr.rel (0) target = $region17
  $region16: #{nce_decoder_forward.1} parent=0 // pred_region
    _
  $region17: #{nce_decoder_forward.1} parent=0 // pred_fallthru
    _
  %v17 = vld [vmem:[%s0] sm:$0xff]
  %v18 = vld [vmem:[%s0 + $0x8] sm:$0xff]
  %v19 = vld [vmem:[%s3] sm:$0xff]
  %v20 = vld [vmem:[%s3 + $0x8] sm:$0xff]
  %v21 = vld [vmem:[%s3 + $0x10] sm:$0xff]
  %v22 = vld [vmem:[%s3 + $0x18] sm:$0xff]
  %v23 = vld [vmem:[%s3 + $0x20] sm:$0xff]
  %v24 = vld [vmem:[%s3 + $0x28] sm:$0xff]
  %v25 = vld [vmem:[%s3 + $0x30] sm:$0xff]
  %v26 = vld [vmem:[%s3 + $0x38] sm:$0xff]
  %vm27 = vcmask 261120
  %v29 = vsel %vm27, %v17, 0
  %v32 = vsel %vm27, %v18, 0
  %v35 = vsel %vm27, %v19, 0
  %v38 = vsel %vm27, %v20, 0
  %v41 = vsel %vm27, %v21, 0
  %v44 = vsel %vm27, %v22, 0
  %v47 = vsel %vm27, %v23, 0
  %v50 = vsel %vm27, %v24, 0
  %v53 = vsel %vm27, %v25, 0
  %v56 = vsel %vm27, %v26, 0
  %58 = vmatprep.subr.mxu0 0.0
  %59 = vmatpush1.xpose.msra.mxu0 %v35
  %60 = vmatprep.subr.mxu0 0.0
  %61 = vmatpush1.xpose.msra.mxu0 %v38
  %62 = vmatprep.subr.mxu0 0.0
  %63 = vmatpush1.xpose.msra.mxu0 %v41
  %64 = vmatprep.subr.mxu0 0.0
  %65 = vmatpush1.xpose.msra.mxu0 %v44
  %66 = vmatprep.subr.mxu0 0.0
  %67 = vmatpush1.xpose.msra.mxu0 %v47
  %68 = vmatprep.subr.mxu0 0.0
  %69 = vmatpush1.xpose.msra.mxu0 %v50
  %70 = vmatprep.subr.mxu0 0.0
  %71 = vmatpush1.xpose.msra.mxu0 %v53
  %72 = vmatprep.subr.mxu0 0.0
  %73 = vmatpush1.xpose.msra.mxu0 %v56
  %74 = vmatprep.subr.mxu0 0.0
  %75 = vmatpush1.xpose.msra.mxu0 0.0
  %76 = vmatprep.subr.mxu0 0.0
  %77 = vmatpush1.xpose.msra.mxu0 0.0
  %78 = vmatprep.subr.mxu0 0.0
  %79 = vmatpush1.xpose.msra.mxu0 0.0
  %80 = vmatprep.subr.mxu0 0.0
  %81 = vmatpush1.xpose.msra.mxu0 0.0
  %82 = vmatprep.subr.mxu0 0.0
  %83 = vmatpush1.xpose.msra.mxu0 0.0
  %84 = vmatprep.subr.mxu0 0.0
  %85 = vmatpush1.xpose.msra.mxu0 0.0
  %86 = vmatprep.subr.mxu0 0.0
  %87 = vmatpush1.xpose.msra.mxu0 0.0
  %88 = vmatprep.subr.mxu0 0.0
  %89 = vmatpush1.xpose.msra.mxu0 0.0
  %90 = vmatprep.subr.mxu0 0.0
  %91 = vmatpush1.xpose.msra.mxu0 0.0
  %92 = vmatprep.subr.mxu0 0.0
  %93 = vmatpush1.xpose.msra.mxu0 0.0
  %94 = vmatprep.subr.mxu0 0.0
  %95 = vmatpush1.xpose.msra.mxu0 0.0
  %96 = vmatprep.subr.mxu0 0.0
  %97 = vmatpush1.xpose.msra.mxu0 0.0
  %98 = vmatprep.subr.mxu0 0.0
  %99 = vmatpush1.xpose.msra.mxu0 0.0
  %100 = vmatprep.subr.mxu0 0.0
  %101 = vmatpush1.xpose.msra.mxu0 0.0
  %102 = vmatprep.subr.mxu0 0.0
  %103 = vmatpush1.xpose.msra.mxu0 0.0
  %104 = vmatprep.subr.mxu0 0.0
  %105 = vmatpush1.xpose.msra.mxu0 0.0
  %106 = vmatprep.subr.mxu0 0.0
  %107 = vmatpush1.xpose.msra.mxu0 0.0
  %108 = vmatprep.subr.mxu0 0.0
  %109 = vmatpush1.xpose.msra.mxu0 0.0
  %110 = vmatprep.subr.mxu0 0.0
  %111 = vmatpush1.xpose.msra.mxu0 0.0
  %112 = vmatprep.subr.mxu0 0.0
  %113 = vmatpush1.xpose.msra.mxu0 0.0
  %114 = vmatprep.subr.mxu0 0.0
  %115 = vmatpush1.xpose.msra.mxu0 0.0
  %116 = vmatprep.subr.mxu0 0.0
  %117 = vmatpush1.xpose.msra.mxu0 0.0
  %118 = vmatprep.subr.mxu0 0.0
  %119 = vmatpush1.xpose.msra.mxu0 0.0
  %120 = vmatprep.subr.mxu0 0.0
  %121 = vmatpush1.xpose.msra.mxu0 0.0
  %122 = vmatprep.mubr.f32.mxu0 0.0
  %123 = vmatmul.mubr.f32.gmra.mrb[0].mxu0 %v29
  %v124 = vpop.f32.mrb[0].mxu0
  %v125 = vadd.f32 0.0, %v124
  %v126 = vpop.f32.mrb[0].mxu0
  %127 = vmatprep.mubr.f32.mxu0 0.0
  %128 = vmatmul.mubr.f32.gmra.mrb[0].mxu0 %v32
  %v129 = vpop.f32.mrb[0].mxu0
  %v130 = vadd.f32 0.0, %v129
  %v131 = vpop.f32.mrb[0].mxu0
  %132 = vdwg.mxu0
  %v133 = vld [vmem:[%s1] sm:$0xff]
  %v134 = vld [vmem:[%s1 + $0x8] sm:$0xff]
  %v135 = vlaneseq
  %v136 = vand.u32 %v135, 127
  %137 = vset.pattern.permute.xlu0 0
  %138 = vperm.xlu0 %137, %v133
  %v139 = vpop.permute.xlu0 %138
  %140 = vset.pattern.permute.xlu0 0
  %141 = vperm.xlu0 %140, %v134
  %v142 = vpop.permute.xlu0 %141
  %vm143 = vcmp.eq.s32.totalorder %v136, %v139
  %vm144 = vcmp.eq.s32.totalorder %v136, %v142
  %v145 = vsel %vm143, %v125, 0.0
  %v146 = vsel %vm144, %v130, 0.0
  %vm147 = vcmask 523264
  %v148 = vsel %vm147, %v145, 0.0
  %149 = vadd.xlane.f32.xlu0 %v148
  %v150 = vpop.xlane.xlu0 %149
  %v151 = vsel %vm147, %v146, 0.0
  %152 = vadd.xlane.f32.xlu0 %v151
  %v153 = vpop.xlane.xlu0 %152
  %154 = vset.pattern.permute.xlu0 1
  %155 = vperm.xlu0 %154, %v133
  %v156 = vpop.permute.xlu0 %155
  %157 = vset.pattern.permute.xlu0 1
  %158 = vperm.xlu0 %157, %v134
  %v159 = vpop.permute.xlu0 %158
  %vm160 = vcmp.eq.s32.totalorder %v136, %v156
  %vm161 = vcmp.eq.s32.totalorder %v136, %v159
  %v162 = vsel %vm160, %v125, 0.0
  %v163 = vsel %vm161, %v130, 0.0
  %v164 = vsel %vm147, %v162, 0.0
  %165 = vadd.xlane.f32.xlu0 %v164
  %v166 = vpop.xlane.xlu0 %165
  %v167 = vsel %vm147, %v163, 0.0
  %168 = vadd.xlane.f32.xlu0 %v167
  %v169 = vpop.xlane.xlu0 %168
  %170 = vset.pattern.permute.xlu0 2
  %171 = vperm.xlu0 %170, %v133
  %v172 = vpop.permute.xlu0 %171
  %173 = vset.pattern.permute.xlu0 2
  %174 = vperm.xlu0 %173, %v134
  %v175 = vpop.permute.xlu0 %174
  %vm176 = vcmp.eq.s32.totalorder %v136, %v172
  %vm177 = vcmp.eq.s32.totalorder %v136, %v175
  %v178 = vsel %vm176, %v125, 0.0
  %v179 = vsel %vm177, %v130, 0.0
  %v180 = vsel %vm147, %v178, 0.0
  %181 = vadd.xlane.f32.xlu0 %v180
  %v182 = vpop.xlane.xlu0 %181
  %v183 = vsel %vm147, %v179, 0.0
  %184 = vadd.xlane.f32.xlu0 %v183
  %v185 = vpop.xlane.xlu0 %184
  %186 = vset.pattern.permute.xlu0 3
  %187 = vperm.xlu0 %186, %v133
  %v188 = vpop.permute.xlu0 %187
  %189 = vset.pattern.permute.xlu0 3
  %190 = vperm.xlu0 %189, %v134
  %v191 = vpop.permute.xlu0 %190
  %vm192 = vcmp.eq.s32.totalorder %v136, %v188
  %vm193 = vcmp.eq.s32.totalorder %v136, %v191
  %v194 = vsel %vm192, %v125, 0.0
  %v195 = vsel %vm193, %v130, 0.0
  %v196 = vsel %vm147, %v194, 0.0
  %197 = vadd.xlane.f32.xlu0 %v196
  %v198 = vpop.xlane.xlu0 %197
  %v199 = vsel %vm147, %v195, 0.0
  %200 = vadd.xlane.f32.xlu0 %v199
  %v201 = vpop.xlane.xlu0 %200
  %202 = vset.pattern.permute.xlu0 4
  %203 = vperm.xlu0 %202, %v133
  %v204 = vpop.permute.xlu0 %203
  %205 = vset.pattern.permute.xlu0 4
  %206 = vperm.xlu0 %205, %v134
  %v207 = vpop.permute.xlu0 %206
  %vm208 = vcmp.eq.s32.totalorder %v136, %v204
  %vm209 = vcmp.eq.s32.totalorder %v136, %v207
  %v210 = vsel %vm208, %v125, 0.0
  %v211 = vsel %vm209, %v130, 0.0
  %v212 = vsel %vm147, %v210, 0.0
  %213 = vadd.xlane.f32.xlu0 %v212
  %v214 = vpop.xlane.xlu0 %213
  %v215 = vsel %vm147, %v211, 0.0
  %216 = vadd.xlane.f32.xlu0 %v215
  %v217 = vpop.xlane.xlu0 %216
  %218 = vset.pattern.permute.xlu0 5
  %219 = vperm.xlu0 %218, %v133
  %v220 = vpop.permute.xlu0 %219
  %221 = vset.pattern.permute.xlu0 5
  %222 = vperm.xlu0 %221, %v134
  %v223 = vpop.permute.xlu0 %222
  %vm224 = vcmp.eq.s32.totalorder %v136, %v220
  %vm225 = vcmp.eq.s32.totalorder %v136, %v223
  %v226 = vsel %vm224, %v125, 0.0
  %v227 = vsel %vm225, %v130, 0.0
  %v228 = vsel %vm147, %v226, 0.0
  %229 = vadd.xlane.f32.xlu0 %v228
  %v230 = vpop.xlane.xlu0 %229
  %v231 = vsel %vm147, %v227, 0.0
  %232 = vadd.xlane.f32.xlu0 %v231
  %v233 = vpop.xlane.xlu0 %232
  %234 = vset.pattern.permute.xlu0 6
  %235 = vperm.xlu0 %234, %v133
  %v236 = vpop.permute.xlu0 %235
  %237 = vset.pattern.permute.xlu0 6
  %238 = vperm.xlu0 %237, %v134
  %v239 = vpop.permute.xlu0 %238
  %vm240 = vcmp.eq.s32.totalorder %v136, %v236
  %vm241 = vcmp.eq.s32.totalorder %v136, %v239
  %v242 = vsel %vm240, %v125, 0.0
  %v243 = vsel %vm241, %v130, 0.0
  %v244 = vsel %vm147, %v242, 0.0
  %245 = vadd.xlane.f32.xlu0 %v244
  %v246 = vpop.xlane.xlu0 %245
  %v247 = vsel %vm147, %v243, 0.0
  %248 = vadd.xlane.f32.xlu0 %v247
  %v249 = vpop.xlane.xlu0 %248
  %250 = vset.pattern.permute.xlu0 7
  %251 = vperm.xlu0 %250, %v133
  %v252 = vpop.permute.xlu0 %251
  %253 = vset.pattern.permute.xlu0 7
  %254 = vperm.xlu0 %253, %v134
  %v255 = vpop.permute.xlu0 %254
  %vm256 = vcmp.eq.s32.totalorder %v136, %v252
  %vm257 = vcmp.eq.s32.totalorder %v136, %v255
  %v258 = vsel %vm256, %v125, 0.0
  %v259 = vsel %vm257, %v130, 0.0
  %v260 = vsel %vm147, %v258, 0.0
  %261 = vadd.xlane.f32.xlu0 %v260
  %v262 = vpop.xlane.xlu0 %261
  %v263 = vsel %vm147, %v259, 0.0
  %264 = vadd.xlane.f32.xlu0 %v263
  %v265 = vpop.xlane.xlu0 %264
  %266 = vset.pattern.permute.xlu0 8
  %267 = vperm.xlu0 %266, %v133
  %v268 = vpop.permute.xlu0 %267
  %269 = vset.pattern.permute.xlu0 8
  %270 = vperm.xlu0 %269, %v134
  %v271 = vpop.permute.xlu0 %270
  %vm272 = vcmp.eq.s32.totalorder %v136, %v268
  %vm273 = vcmp.eq.s32.totalorder %v136, %v271
  %v274 = vsel %vm272, %v125, 0.0
  %v275 = vsel %vm273, %v130, 0.0
  %v276 = vsel %vm147, %v274, 0.0
  %277 = vadd.xlane.f32.xlu0 %v276
  %v278 = vpop.xlane.xlu0 %277
  %v279 = vsel %vm147, %v275, 0.0
  %280 = vadd.xlane.f32.xlu0 %v279
  %v281 = vpop.xlane.xlu0 %280
  %282 = vset.pattern.permute.xlu0 9
  %283 = vperm.xlu0 %282, %v133
  %v284 = vpop.permute.xlu0 %283
  %285 = vset.pattern.permute.xlu0 9
  %286 = vperm.xlu0 %285, %v134
  %v287 = vpop.permute.xlu0 %286
  %vm288 = vcmp.eq.s32.totalorder %v136, %v284
  %vm289 = vcmp.eq.s32.totalorder %v136, %v287
  %v290 = vsel %vm288, %v125, 0.0
  %v291 = vsel %vm289, %v130, 0.0
  %v292 = vsel %vm147, %v290, 0.0
  %293 = vadd.xlane.f32.xlu0 %v292
  %v294 = vpop.xlane.xlu0 %293
  %v295 = vsel %vm147, %v291, 0.0
  %296 = vadd.xlane.f32.xlu0 %v295
  %v297 = vpop.xlane.xlu0 %296
  %298 = vset.pattern.permute.xlu0 10
  %299 = vperm.xlu0 %298, %v133
  %v300 = vpop.permute.xlu0 %299
  %301 = vset.pattern.permute.xlu0 10
  %302 = vperm.xlu0 %301, %v134
  %v303 = vpop.permute.xlu0 %302
  %vm304 = vcmp.eq.s32.totalorder %v136, %v300
  %vm305 = vcmp.eq.s32.totalorder %v136, %v303
  %v306 = vsel %vm304, %v125, 0.0
  %v307 = vsel %vm305, %v130, 0.0
  %v308 = vsel %vm147, %v306, 0.0
  %309 = vadd.xlane.f32.xlu0 %v308
  %v310 = vpop.xlane.xlu0 %309
  %v311 = vsel %vm147, %v307, 0.0
  %312 = vadd.xlane.f32.xlu0 %v311
  %v313 = vpop.xlane.xlu0 %312
  %vm314 = vcmask 7168
  %v315 = vsel %vm314, %v150, %v166
  %v316 = vsel %vm314, %v153, %v169
  %vm317 = vcmask 15360
  %v318 = vsel %vm317, %v315, %v182
  %v319 = vsel %vm317, %v316, %v185
  %vm320 = vcmask 23552
  %v321 = vsel %vm320, %v318, %v198
  %v322 = vsel %vm320, %v319, %v201
  %vm323 = vcmask 31744
  %v324 = vsel %vm323, %v321, %v214
  %v325 = vsel %vm323, %v322, %v217
  %vm326 = vcmask 39936
  %v327 = vsel %vm326, %v324, %v230
  %v328 = vsel %vm326, %v325, %v233
  %vm329 = vcmask 48128
  %v330 = vsel %vm329, %v327, %v246
  %v331 = vsel %vm329, %v328, %v249
  %vm332 = vcmask 56320
  %v333 = vsel %vm332, %v330, %v262
  %v334 = vsel %vm332, %v331, %v265
  %vm335 = vcmask 64512
  %v336 = vsel %vm335, %v333, %v278
  %v337 = vsel %vm335, %v334, %v281
  %vm338 = vcmask 72704
  %v339 = vsel %vm338, %v336, %v294
  %v340 = vsel %vm338, %v337, %v297
  %vm341 = vcmask 80896
  %v342 = vsel %vm341, %v339, %v310
  %v343 = vsel %vm341, %v340, %v313
  %v344 = vld [vmem:[%s2] sm:$0xff]
  %v345 = vld [vmem:[%s2 + $0x8] sm:$0xff]
  %v346 = vadd.f32 %v342, %v344
  %v347 = vadd.f32 %v343, %v345
  %v348 = vsub.f32 %v346, 9.0
  %v349 = vsub.f32 %v347, 9.0
  %v350 = vmul.f32 %v348, 1.442695
  %v351 = vpow.pop %v350
  %v352 = vmul.f32 %v349, 1.442695
  %v353 = vpow.pop %v352
  %vm354 = vcmask 89088
  %355 = vst.msk [vmem:[%s4] sm:$0xff] %vm354, %v351
  %356 = vst.msk [vmem:[%s4 + $0x8] sm:$0xff] %vm354, %v353
  // Predicated region
  $region18: #{nce_decoder_forward.1} parent=0 // pred_check
    _
  $region19: #{nce_decoder_forward.1} parent=0 // pred_check_branch
    %358 = sbr.rel (0) target = $region21
  $region20: #{nce_decoder_forward.1} parent=0 // pred_region
    _
  $region21: #{nce_decoder_forward.1} parent=0 // pred_fallthru
    _
  // Predicated region
  $region22: #{nce_decoder_forward.1} parent=0 // pred_check
    _
  $region23: #{nce_decoder_forward.1} parent=0 // pred_check_branch
    %360 = sbr.rel (0) target = $region25
  $region24: #{nce_decoder_forward.1} parent=0 // pred_region
    _
  $region25: #{nce_decoder_forward.1} parent=0 // pred_fallthru
    _

</llo_original>
